<compile_context>
chip_gen: v6e
topology: v6e:2x2x1
jax: 0.10.0
libtpu: 0.0.40
codegen_flags: <defaults>
</compile_context>

<pallas_src>
import functools

import jax
import jax.numpy as jnp
from jax.experimental import pallas as pl
from jax.experimental.pallas import tpu as pltpu


def _dwconv1d_kernel(x_ref, w_ref, o_ref, xpad_ref, *, padding):
    """One batch element per grid step (stride-1 dense depthwise conv).

    x_ref    : (1, C, T)          unpadded input (channels already expanded to C_out)
    w_ref    : (C, Ks)            depthwise filters, f32
    o_ref    : (1, C, T_dense)    dense output block, T_dense = T + 2*pad - Ks + 1
    xpad_ref : (C, T + 2*pad)     f32 VMEM scratch = zero-padded working slab
    """
    ks = w_ref.shape[1]
    t_in = x_ref.shape[2]
    t_out = o_ref.shape[2]
    c = o_ref.shape[1]

    # Zero the tiny padding strips.  Done every step (not only at program_id==0) so the
    # kernel stays correct when the batch axis is sharded across TensorCores.
    if padding > 0:
        zero_strip = jnp.zeros((c, padding), jnp.float32)
        xpad_ref[:, :padding] = zero_strip
        xpad_ref[:, padding + t_in:] = zero_strip

    # Single f32 convert + VMEM copy per step; every tap read below is plain f32.
    xpad_ref[:, padding:padding + t_in] = x_ref[0].astype(jnp.float32)

    w = w_ref[...]                                   # (C, Ks), already f32
    acc = jnp.zeros((c, t_out), jnp.float32)
    for k in range(ks):                              # small static tap loop
        # whole-slab shifted view, (C, T_out); weight column lane-broadcast FMA
        acc = acc + w[:, k:k + 1] * xpad_ref[:, k:k + t_out]

    o_ref[0] = acc.astype(o_ref.dtype)


def depthwise_conv1d(x, w, *, stride=1, padding=0):
    """x: (B, C_in, T); w: (C_out, Ks) with C_out % C_in == 0. Returns (B, C_out, T_out)."""
    B, c_in, T = x.shape
    c_out, ks = w.shape
    assert c_out % c_in == 0, "out_channels must be a multiple of in_channels"
    k_mult = c_out // c_in
    assert T + 2 * padding >= ks, "input too short for kernel_size/padding"
    t_out = (T + 2 * padding - ks) // stride + 1
    t_dense = T + 2 * padding - ks + 1               # stride-1 output length (in-kernel)

    if k_mult > 1:
        # Depthwise multiplier: expand input channels once so the kernel is a pure
        # per-channel conv.  Output channel oc uses input channel oc // k_mult, matching
        # PyTorch's grouped-conv ordering.  k_mult == 1 (the usual conformer config)
        # takes this no-copy path.
        x = jnp.repeat(x, k_mult, axis=1)            # (B, C_out, T)
    w32 = w.astype(jnp.float32)

    kernel = functools.partial(_dwconv1d_kernel, padding=padding)

    # Rough per-step VMEM budget: double-buffered in/out blocks + f32 scratch + weights.
    est = (2 * c_out * T * x.dtype.itemsize
           + 2 * c_out * t_dense * x.dtype.itemsize
           + c_out * (T + 2 * padding) * 4
           + c_out * ks * 4)
    vmem_limit = int(min(max(4 * est, 8 << 20), 32 << 20))

    dense = pl.pallas_call(
        kernel,
        out_shape=jax.ShapeDtypeStruct((B, c_out, t_dense), x.dtype),
        grid=(B,),
        in_specs=[
            pl.BlockSpec((1, c_out, T), lambda b: (b, 0, 0)),    # per-batch input slab
            pl.BlockSpec((c_out, ks), lambda b: (0, 0)),         # resident weights
        ],
        out_specs=pl.BlockSpec((1, c_out, t_dense), lambda b: (b, 0, 0)),
        scratch_shapes=[pltpu.VMEM((c_out, T + 2 * padding), jnp.float32)],
        compiler_params=pltpu.CompilerParams(
            dimension_semantics=("parallel",),
            vmem_limit_bytes=vmem_limit,
        ),
    )(x, w32)

    if stride == 1:
        return dense
    # stride > 1: decimate the dense result once (plain XLA slice in the wrapper).
    return dense[:, :, :(t_out - 1) * stride + 1:stride]


if __name__ == "__main__":
    key = jax.random.PRNGKey(0)
    k1, k2, k3, k4 = jax.random.split(key, 4)

    def ref_conv(x, w, stride, padding, groups):
        return jax.lax.conv_general_dilated(
            x, w[:, None, :], window_strides=(stride,), padding=[(padding, padding)],
            dimension_numbers=("NCH", "OIH", "NCH"), feature_group_count=groups)

    # Config A: conformer-style depthwise conv (multiplier 1, "same" padding, stride 1).
    xA = jax.random.normal(k1, (2, 8, 64), dtype=jnp.float32)
    wA = jax.random.normal(k2, (8, 3), dtype=jnp.float32) * 0.1
    outA = jax.block_until_ready(depthwise_conv1d(xA, wA, stride=1, padding=1))
    refA = ref_conv(xA, wA, stride=1, padding=1, groups=8)
    assert outA.shape == refA.shape
    assert jnp.allclose(outA, refA, atol=1e-5, rtol=1e-5), "mismatch (config A)"

    # Config B: depthwise multiplier 2 with stride 2.
    xB = jax.random.normal(k3, (2, 4, 16), dtype=jnp.float32)
    wB = jax.random.normal(k4, (8, 3), dtype=jnp.float32) * 0.1
    outB = jax.block_until_ready(depthwise_conv1d(xB, wB, stride=2, padding=1))
    refB = ref_conv(xB, wB, stride=2, padding=1, groups=4)
    assert outB.shape == refB.shape
    assert jnp.allclose(outB, refB, atol=1e-5, rtol=1e-5), "mismatch (config B)"

    print("KERNEL_OK")
</pallas_src>

<mosaic_0001>
module attributes {stable_mosaic.version = 11 : i64} {
  func.func @_dwconv1d_kernel(%arg0: i32, %arg1: memref<1x8x64xf32, #tpu.memory_space<vmem>>, %arg2: memref<8x3xf32, #tpu.memory_space<vmem>>, %arg3: memref<1x8x64xf32, #tpu.memory_space<vmem>>, %arg4: memref<8x66xf32, #tpu.memory_space<vmem>>) attributes {dimension_semantics = [#tpu.dimension_semantics<parallel>], iteration_bounds = array<i64: 2>, scalar_prefetch = 0 : i64, scratch_operands = 1 : i64, tpu.core_type = #tpu.core_type<tc>, window_params = [{transform_indices = @transform_0, window_bounds = array<i64: 1, 8, 64>}, {pipeline_mode = #tpu.pipeline_mode<synchronous>, transform_indices = @transform_1, window_bounds = array<i64: 8, 3>}, {transform_indices = @transform_2, window_bounds = array<i64: 1, 8, 64>}]} {
    %cst = arith.constant 0.000000e+00 : f32
    %0 = vector.broadcast %cst : f32 to vector<8x1xf32>
    %c0 = arith.constant 0 : index
    %c0_0 = arith.constant 0 : index
    %1 = vector.load %arg4[%c0, %c0_0] : memref<8x66xf32, #tpu.memory_space<vmem>>, vector<8x1xf32>
    tpu.vector_store %arg4[%c0, %c0_0], %0 {strides = array<i32>} : memref<8x66xf32, #tpu.memory_space<vmem>>, vector<8x1xf32>,
    %c0_1 = arith.constant 0 : index
    %c65 = arith.constant 65 : index
    %2 = vector.load %arg4[%c0_1, %c65] : memref<8x66xf32, #tpu.memory_space<vmem>>, vector<8x1xf32>
    tpu.vector_store %arg4[%c0_1, %c65], %0 {strides = array<i32>} : memref<8x66xf32, #tpu.memory_space<vmem>>, vector<8x1xf32>,
    %c0_2 = arith.constant 0 : index
    %c0_3 = arith.constant 0 : index
    %c0_4 = arith.constant 0 : index
    %3 = vector.load %arg1[%c0_2, %c0_3, %c0_4] : memref<1x8x64xf32, #tpu.memory_space<vmem>>, vector<1x8x64xf32>
    %4 = vector.shape_cast %3 : vector<1x8x64xf32> to vector<8x64xf32>
    %c0_5 = arith.constant 0 : index
    %c1 = arith.constant 1 : index
    %5 = vector.load %arg4[%c0_5, %c1] : memref<8x66xf32, #tpu.memory_space<vmem>>, vector<8x64xf32>
    tpu.vector_store %arg4[%c0_5, %c1], %4 {strides = array<i32>} : memref<8x66xf32, #tpu.memory_space<vmem>>, vector<8x64xf32>,
    %c0_6 = arith.constant 0 : index
    %c0_7 = arith.constant 0 : index
    %6 = vector.load %arg2[%c0_6, %c0_7] : memref<8x3xf32, #tpu.memory_space<vmem>>, vector<8x3xf32>
    %cst_8 = arith.constant 0.000000e+00 : f32
    %7 = vector.broadcast %cst_8 : f32 to vector<8x64xf32>
    %8 = vector.extract_strided_slice %6 {offsets = [0, 0], sizes = [8, 1], strides = [1, 1]} : vector<8x3xf32> to vector<8x1xf32>
    %c0_9 = arith.constant 0 : index
    %c0_10 = arith.constant 0 : index
    %9 = vector.load %arg4[%c0_9, %c0_10] : memref<8x66xf32, #tpu.memory_space<vmem>>, vector<8x64xf32>
    %10 = vector.broadcast %8 : vector<8x1xf32> to vector<8x64xf32>
    %11 = arith.mulf %10, %9 : vector<8x64xf32>
    %12 = arith.addf %7, %11 : vector<8x64xf32>
    %13 = vector.extract_strided_slice %6 {offsets = [0, 1], sizes = [8, 1], strides = [1, 1]} : vector<8x3xf32> to vector<8x1xf32>
    %c0_11 = arith.constant 0 : index
    %c1_12 = arith.constant 1 : index
    %14 = vector.load %arg4[%c0_11, %c1_12] : memref<8x66xf32, #tpu.memory_space<vmem>>, vector<8x64xf32>
    %15 = vector.broadcast %13 : vector<8x1xf32> to vector<8x64xf32>
    %16 = arith.mulf %15, %14 : vector<8x64xf32>
    %17 = arith.addf %12, %16 : vector<8x64xf32>
    %18 = vector.extract_strided_slice %6 {offsets = [0, 2], sizes = [8, 1], strides = [1, 1]} : vector<8x3xf32> to vector<8x1xf32>
    %c0_13 = arith.constant 0 : index
    %c2 = arith.constant 2 : index
    %19 = vector.load %arg4[%c0_13, %c2] : memref<8x66xf32, #tpu.memory_space<vmem>>, vector<8x64xf32>
    %20 = vector.broadcast %18 : vector<8x1xf32> to vector<8x64xf32>
    %21 = arith.mulf %20, %19 : vector<8x64xf32>
    %22 = arith.addf %17, %21 : vector<8x64xf32>
    %c0_14 = arith.constant 0 : index
    %c0_15 = arith.constant 0 : index
    %c0_16 = arith.constant 0 : index
    %23 = vector.load %arg3[%c0_14, %c0_15, %c0_16] : memref<1x8x64xf32, #tpu.memory_space<vmem>>, vector<1x8x64xf32>
    %24 = vector.shape_cast %23 : vector<1x8x64xf32> to vector<8x64xf32>
    %25 = vector.shape_cast %22 : vector<8x64xf32> to vector<1x8x64xf32>
    tpu.vector_store %arg3[%c0_14, %c0_15, %c0_16], %25 {strides = array<i32>} : memref<1x8x64xf32, #tpu.memory_space<vmem>>, vector<1x8x64xf32>,
    return
  }
  func.func @transform_0(%arg0: i32) -> (i32, i32, i32) {
    %c0_i32 = arith.constant 0 : i32
    %c0_i32_0 = arith.constant 0 : i32
    %c0_i32_1 = arith.constant 0 : i32
    return %arg0, %c0_i32, %c0_i32_0 : i32, i32, i32
  }
  func.func @transform_1(%arg0: i32) -> (i32, i32) {
    %c0_i32 = arith.constant 0 : i32
    %c0_i32_0 = arith.constant 0 : i32
    %c0_i32_1 = arith.constant 0 : i32
    return %c0_i32, %c0_i32_0 : i32, i32
  }
  func.func @transform_2(%arg0: i32) -> (i32, i32, i32) {
    %c0_i32 = arith.constant 0 : i32
    %c0_i32_0 = arith.constant 0 : i32
    %c0_i32_1 = arith.constant 0 : i32
    return %arg0, %c0_i32, %c0_i32_0 : i32, i32, i32
  }
}

</mosaic_0001>

<llo_original>
// kernel: tpu_custom_call.1
$region0: #{tpu_custom_call.1}
  #allocation0 [shape = 'u32[]', space=smem, size = 0x4, offset = 0x4, fixed_abs, tag = 'smem constant byte address 0x4 - core index']
  #allocation1 [shape = 'u32[144,128]{1,0:T(1,128)}', space=vmem, size = 0x12000, scoped, tag = 'internal scratch']
  #allocation2 [shape = 'f32[8,66]{1,0:T(8,128)}', space=vmem, size = 0x1000, scoped, tag = 'scratch operand']
  %s0 = inlined_call_operand.hbm [shape: f32[2,8,64], index: 0, kind: input, shape index: {}]
  %s1 = inlined_call_operand.vmem [shape: f32[8,3], index: 1, kind: input, shape index: {}]
  %s2 = inlined_call_operand.hbm [shape: f32[2,8,64], index: 2, kind: output, shape index: {}]
  %s3 = sld [smem:[#allocation0]]
  $region45: #{tpu_custom_call.1} parent=0
    _
  %s5 = ssub.s32 1, %s3
  %s6 = scalar_select 0, %s5, %s3
  $region1: #{tpu_custom_call.1} parent=0
    #allocation3 [shape = 'u8[8192]{0}', space=vmem, size = 0x2000, scoped, tag = 'input window, operand 0']
    #allocation4 [shape = 's32[2]{0}', space=sflag, size = 0x8, scoped, tag = 'scoped memory for tpu_custom_call.1']
    #allocation5 [shape = 's32[2]{0}', space=sflag, size = 0x8, scoped, tag = 'scoped memory for tpu_custom_call.1']
    #allocation6 [shape = 'u8[8192]{0}', space=vmem, size = 0x2000, scoped, tag = 'output window, operand 0']
    %7 = vsyncpa [#allocation4], 0
    %s8 = scalar_lea.sflag [#allocation4], 1
    %9 = vsyncpa %s8, 0
    %10 = vsyncpa [#allocation5], 0
    %s11 = scalar_lea.sflag [#allocation5], 1
    %12 = vsyncpa %s11, 0
    loop: start=0, step=1, limit=4
    $region2: #{tpu_custom_call.1} parent=1 // loop_pre_header
      _
    $region3: #{tpu_custom_call.1} parent=1 // loop_header
      %s14 = sphi 0, %s18
      %p15 = scmp.ge.s32.totalorder %s14, 4
      %s24 = sphi 0, %s26
      %s27 = sphi 0, %s24
      %s28 = sphi 0, %s27
      %s44 = sphi 0, %s28
      %s48 = sphi 0, %s48
      %s50 = sphi 0, %s48
      %s51 = sphi 0, %s50
      %s65 = sphi 0, %s51
      %s71 = sphi 0, %s73
      %s74 = sphi 0, %s71
      %s75 = sphi 0, %s74
      %s91 = sphi 0, %s75
    $region4: #{tpu_custom_call.1} parent=1 // loop_header_branch
      %17 = sbr.rel (%p15) target = $region8
    $region5: #{tpu_custom_call.1} parent=1 // loop_body
      %s19 = ssub.s32 %s14, 1
      %s20 = ssub.s32 %s14, 2
      %s21 = sadd.s32 %s14, 1
      %s22 = ssub.s32 %s14, %s21
      %p23 = scmp.eq.s32.totalorder %s22, 0
      %s25 = sadd.s32 %s24, 1
      %s26 = scalar_select %p23, %s24, %s25
      %p29 = pneg %p23
      %p30 = scmp.eq.s32.totalorder %s14, 1
      %p31 = por %p29, %p30
      %p32 = scmp.ne.s32.totalorder %s24, %s27
      %p33 = scmp.eq.s32.totalorder %s14, 0
      %p34 = por %p32, %p33
      %p35 = scmp.ne.s32.totalorder %s24, %s27
      %p36 = scmp.eq.s32.totalorder %s19, 1
      %p37 = por %p35, %p36
      %p38 = scmp.ne.s32.totalorder %s27, %s28
      %p39 = scmp.eq.s32.totalorder %s19, 0
      %p40 = por %p38, %p39
      %p41 = scmp.ne.s32.totalorder %s27, %s28
      %p42 = scmp.eq.s32.totalorder %s20, 1
      %p43 = por %p41, %p42
      %p45 = scmp.ne.s32.totalorder %s28, %s44
      %p46 = scmp.eq.s32.totalorder %s20, 0
      %p47 = por %p45, %p46
      %s49 = sadd.s32 %s48, 1
      %p52 = scmp.eq.s32.totalorder %s14, 1
      %p53 = scmp.ne.s32.totalorder %s48, %s50
      %p54 = scmp.eq.s32.totalorder %s14, 0
      %p55 = por %p53, %p54
      %p56 = scmp.ne.s32.totalorder %s48, %s50
      %p57 = scmp.eq.s32.totalorder %s19, 1
      %p58 = por %p56, %p57
      %p59 = scmp.ne.s32.totalorder %s50, %s51
      %p60 = scmp.eq.s32.totalorder %s19, 0
      %p61 = por %p59, %p60
      %p62 = scmp.ne.s32.totalorder %s50, %s51
      %p63 = scmp.eq.s32.totalorder %s20, 1
      %p64 = por %p62, %p63
      %p66 = scmp.ne.s32.totalorder %s51, %s65
      %p67 = scmp.eq.s32.totalorder %s20, 0
      %p68 = por %p66, %p67
      %s69 = ssub.s32 %s14, %s21
      %p70 = scmp.eq.s32.totalorder %s69, 0
      %s72 = sadd.s32 %s71, 1
      %s73 = scalar_select %p70, %s71, %s72
      %p76 = pneg %p70
      %p77 = scmp.eq.s32.totalorder %s14, 1
      %p78 = por %p76, %p77
      %p79 = scmp.ne.s32.totalorder %s71, %s74
      %p80 = scmp.eq.s32.totalorder %s14, 0
      %p81 = por %p79, %p80
      %p82 = scmp.ne.s32.totalorder %s71, %s74
      %p83 = scmp.eq.s32.totalorder %s19, 1
      %p84 = por %p82, %p83
      %p85 = scmp.ne.s32.totalorder %s74, %s75
      %p86 = scmp.eq.s32.totalorder %s19, 0
      %p87 = por %p85, %p86
      %p88 = scmp.ne.s32.totalorder %s74, %s75
      %p89 = scmp.eq.s32.totalorder %s20, 1
      %p90 = por %p88, %p89
      %p92 = scmp.ne.s32.totalorder %s75, %s91
      %p93 = scmp.eq.s32.totalorder %s20, 0
      %p94 = por %p92, %p93
      %p95 = scmp.le.s32.totalorder 1, %s14
      %p96 = scmp.lt.s32.totalorder %s14, 3
      %p97 = pnand %p95, %p96
      %p98 = pneg %p97
      // Predicated region
      $region9: #{tpu_custom_call.1} parent=5 // pred_check
        _
      $region10: #{tpu_custom_call.1} parent=5 // pred_check_branch
        %100 = sbr.rel (%p97) target = $region12
      $region11: #{tpu_custom_call.1} parent=5 // pred_region
        %s101 = ssub.s32 %s14, 1
        // Predicated region
        $region13: #{tpu_custom_call.1} parent=11 // pred_check
          %p102 = pneg %p61
        $region14: #{tpu_custom_call.1} parent=11 // pred_check_branch
          %104 = sbr.rel (%p102) target = $region16
        $region15: #{tpu_custom_call.1} parent=11 // pred_region
          _
        $region16: #{tpu_custom_call.1} parent=11 // pred_fallthru
          _
      $region12: #{tpu_custom_call.1} parent=5 // pred_fallthru
        _
      %p105 = scmp.lt.s32.totalorder %s14, 2
      // Predicated region
      $region17: #{tpu_custom_call.1} parent=5 // pred_check
        %p106 = pneg %p105
      $region18: #{tpu_custom_call.1} parent=5 // pred_check_branch
        %108 = sbr.rel (%p106) target = $region20
      $region19: #{tpu_custom_call.1} parent=5 // pred_region
        // Predicated region
        $region21: #{tpu_custom_call.1} parent=19 // pred_check
          %p109 = pneg %p34
        $region22: #{tpu_custom_call.1} parent=19 // pred_check_branch
          %111 = sbr.rel (%p109) target = $region24
        $region23: #{tpu_custom_call.1} parent=19 // pred_region
          %s112 = sand.u32 %s24, 1
          %s113 = scalar_lea.sflag [#allocation4], %s112
          %s114 = sand.u32 %s24, 1
          %s115 = smul.addr %s114, 8
          %s116 = scalar_lea.vmem [#allocation3], %s115
          %s118 = ssub.s32 128, 128
          %119 = vsyncadd %s113, %s118
          %s120 = smul.addr %s14, 128
          %s121 = scalar_lea.hbm %s0, %s120
          %s123 = sshll.u32 %s116, 4
          %s124 = int_to_ptr.vmem [resolvable:$true] %s123
          %126 = dma.hbm_to_vmem [thread:$0]  %s121, 128, %s124, %s113
        $region24: #{tpu_custom_call.1} parent=19 // pred_fallthru
          _
      $region20: #{tpu_custom_call.1} parent=5 // pred_fallthru
        _
      %p127 = scmp.le.s32.totalorder 1, %s14
      %p128 = scmp.lt.s32.totalorder %s14, 3
      %p129 = pnand %p127, %p128
      %p130 = pneg %p129
      // Predicated region
      $region25: #{tpu_custom_call.1} parent=5 // pred_check
        _
      $region26: #{tpu_custom_call.1} parent=5 // pred_check_branch
        %132 = sbr.rel (%p129) target = $region28
      $region27: #{tpu_custom_call.1} parent=5 // pred_region
        %s133 = ssub.s32 %s14, 1
        %s134 = sand.u32 %s27, 1
        %s135 = scalar_lea.sflag [#allocation4], %s134
        %s136 = sand.u32 %s27, 1
        %s137 = smul.addr %s136, 8
        %s138 = scalar_lea.vmem [#allocation3], %s137
        // Predicated region
        $region29: #{tpu_custom_call.1} parent=27 // pred_check
          %p139 = pneg %p40
        $region30: #{tpu_custom_call.1} parent=27 // pred_check_branch
          %141 = sbr.rel (%p139) target = $region32
        $region31: #{tpu_custom_call.1} parent=27 // pred_region
          %142 = dma.done %s135, 128
        $region32: #{tpu_custom_call.1} parent=27 // pred_fallthru
          _
        %s143 = sand.u32 %s27, 1
        %s144 = scalar_lea.sflag [#allocation4], %s143
        %s145 = sand.u32 %s27, 1
        %s146 = smul.addr %s145, 8
        %s147 = scalar_lea.vmem [#allocation3], %s146
        %p148 = pneg %p40
        %p149 = pneg %p37
        %p150 = pneg %p61
        %p151 = pneg %p58
        %p152 = pneg %p87
        %p153 = pneg %p84
        %s154 = sand.u32 %s74, 1
        %s155 = scalar_lea.sflag [#allocation5], %s154
        %s156 = sand.u32 %s74, 1
        %s157 = smul.addr %s156, 8
        %s158 = scalar_lea.vmem [#allocation6], %s157
        %vm159 = vcmask 7168
        %160 = vst.msk [vmem:[#allocation2] sm:$0xff] %vm159, 0.0
        %vm161 = vcmask 540168
        %162 = vst.msk [vmem:[#allocation2] sm:$0xff] %vm161, 0.0
        %v163 = vld [vmem:[%s138] sm:$0xff]
        %165 = vrot.lane.b32.xlu0 %v163, 1
        %v166 = vpop.permute.xlu0 %165
        %vm168 = vcmask 531464
        %169 = vst.msk [vmem:[#allocation2] sm:$0xff] %vm168, %v166
        %v170 = vld [vmem:[%s1] sm:$0xff]
        %v171 = vld [vmem:[#allocation2] sm:$0xff]
        %173 = vset.pattern.permute.xlu0 0
        %174 = vperm.xlu0 %173, %v170
        %v175 = vpop.permute.xlu0 %174
        %v177 = vmul.f32 %v175, %v171
        %v178 = vadd.f32 %v177, 0.0
        %179 = vset.pattern.permute.xlu0 1
        %180 = vperm.xlu0 %179, %v170
        %v181 = vpop.permute.xlu0 %180
        %v183 = vmul.f32 %v181, %v171
        %185 = vrot.lane.b32.xlu0 %v183, 127
        %v186 = vpop.permute.xlu0 %185
        %v188 = vadd.f32 %v178, %v186
        %189 = vset.pattern.permute.xlu0 2
        %190 = vperm.xlu0 %189, %v170
        %v191 = vpop.permute.xlu0 %190
        %v193 = vmul.f32 %v191, %v171
        %195 = vrot.lane.b32.xlu0 %v193, 126
        %v196 = vpop.permute.xlu0 %195
        %v198 = vadd.f32 %v188, %v196
        %vm199 = vcmask 523264
        %200 = vst.msk [vmem:[%s158] sm:$0xff] %vm199, %v198
        %s201 = sand.u32 %s74, 1
        %s202 = scalar_lea.sflag [#allocation5], %s201
        %s203 = sand.u32 %s74, 1
        %s204 = smul.addr %s203, 8
        %s205 = scalar_lea.vmem [#allocation6], %s204
        // Predicated region
        $region33: #{tpu_custom_call.1} parent=27 // pred_check
          %p206 = pneg %p84
        $region34: #{tpu_custom_call.1} parent=27 // pred_check_branch
          %208 = sbr.rel (%p206) target = $region36
        $region35: #{tpu_custom_call.1} parent=27 // pred_region
          %s210 = ssub.s32 128, 128
          %211 = vsyncadd %s202, %s210
          %s212 = smul.addr %s19, 128
          %s213 = scalar_lea.hbm %s2, %s212
          %s215 = sshll.u32 %s205, 4
          %s216 = int_to_ptr.vmem [resolvable:$true] %s215
          %218 = dma.vmem_to_hbm [thread:$0]  %s216, 128, %s213, %s202
        $region36: #{tpu_custom_call.1} parent=27 // pred_fallthru
          _
      $region28: #{tpu_custom_call.1} parent=5 // pred_fallthru
        _
      %p219 = scmp.le.s32.totalorder 2, %s14
      // Predicated region
      $region37: #{tpu_custom_call.1} parent=5 // pred_check
        %p220 = pneg %p219
      $region38: #{tpu_custom_call.1} parent=5 // pred_check_branch
        %222 = sbr.rel (%p220) target = $region40
      $region39: #{tpu_custom_call.1} parent=5 // pred_region
        %s223 = ssub.s32 %s14, 2
        // Predicated region
        $region41: #{tpu_custom_call.1} parent=39 // pred_check
          %p224 = pneg %p90
        $region42: #{tpu_custom_call.1} parent=39 // pred_check_branch
          %226 = sbr.rel (%p224) target = $region44
        $region43: #{tpu_custom_call.1} parent=39 // pred_region
          %s227 = sand.u32 %s75, 1
          %s228 = scalar_lea.sflag [#allocation5], %s227
          %s229 = sand.u32 %s75, 1
          %s230 = smul.addr %s229, 8
          %s231 = scalar_lea.vmem [#allocation6], %s230
          %232 = dma.done %s228, 128
        $region44: #{tpu_custom_call.1} parent=39 // pred_fallthru
          _
      $region40: #{tpu_custom_call.1} parent=5 // pred_fallthru
        _
    $region6: #{tpu_custom_call.1} parent=1 // loop_footer
      %s18 = sadd.s32 1, %s14
    $region7: #{tpu_custom_call.1} parent=1 // loop_footer_branch
      %13 = sbr.rel target = $region3
    $region8: #{tpu_custom_call.1} parent=1 // loop_exit
      _
    %233 = vsyncpa [#allocation4], 1
    %s234 = scalar_lea.sflag [#allocation4], 1
    %235 = vsyncpa %s234, 1
    %236 = vsyncpa [#allocation5], 1
    %s237 = scalar_lea.sflag [#allocation5], 1
    %238 = vsyncpa %s237, 1

</llo_original>
